<compile_context>
chip_gen: v5e
topology: v5e:2x2
jax: 0.10.0
libtpu: 0.0.40
codegen_flags: <defaults>
</compile_context>

<pallas_src>
import math

import jax
import jax.numpy as jnp
from jax import lax
from jax.experimental import pallas as pl
from jax.experimental.pallas import tpu as pltpu


def _round_up(x, m):
    return (x + m - 1) // m * m


_HAS_BUFFERED = hasattr(pl, "Buffered")


def _invariant_spec(block_shape, index_map):
    """BlockSpec for grid-invariant operands; single-buffered when supported."""
    if _HAS_BUFFERED:
        try:
            return pl.BlockSpec(block_shape, index_map,
                                pipeline_mode=pl.Buffered(1))
        except TypeError:
            pass  # older jax: fall back to default (double-buffered)
    return pl.BlockSpec(block_shape, index_map)


def _pick_row_tile(n, tm_max):
    """Row tile: 16-aligned (bf16 sublane pairs), capped so the 'parallel'
    row axis has >= 2 tiles when N allows (keeps both v7x TensorCores busy)."""
    tm = min(tm_max, _round_up(n, 16))
    if n > 256 and _round_up(n, tm) // tm < 2:
        tm = min(tm, _round_up(-(-n // 2), 256))
    return tm


def _vmem_limit_bytes(tm, tn, e):
    """Scoped-VMEM budget from the real tile footprint + headroom."""
    e_l = _round_up(e, 128)
    tn_l = _round_up(tn, 128)
    bf2, f4 = 2, 4
    need = (
        2 * tm * e_l * bf2        # features tile (double-buffered)
        + 1 * e_l * e_l * bf2     # dense weight (single-buffered)
        + 1 * 8 * e_l * f4        # packed bias/gamma/beta (sublane padded)
        + 2 * tn * e_l * bf2      # W_out tile (double-buffered)
        + 2 * 8 * tn_l * f4       # output-bias tile
        + 2 * tm * tn_l * bf2     # bf16 logits tile (double-buffered)
        + 1 * tm * e_l * bf2      # h scratch
    )
    # 1.5x + 8 MiB headroom for compiler-internal scratch; clamp to a range
    # that is safe on every generation (v7x: 64 MiB physical per TC).
    return int(min(max(need * 3 // 2 + (8 << 20), 32 << 20), 100 << 20))


def _lm_head_kernel(feat_ref, wd_ref, p_ref, wout_ref, bout_ref, out_ref, h_ref):
    """One (row-tile i, vocab-tile j) grid step.

    feat_ref : [TM, E]  bf16   row tile of flattened features
    wd_ref   : [E,  E]  bf16   dense weight (PyTorch (out, in) layout)
    p_ref    : [3,  E]  f32    packed [dense bias; LN gamma; LN beta]
    wout_ref : [TN, E]  bf16   output-projection weight tile (vocab rows)
    bout_ref : [1, TN]  f32    output bias tile
    out_ref  : [TM, TN] bf16   logits tile
    h_ref    : [TM, E]  bf16   VMEM scratch: dense+gelu+LN result, reused
                               across all vocab tiles j of the same row tile i
    """
    j = pl.program_id(1)

    # Head (dense -> gelu -> LayerNorm) once per row tile.
    # INVARIANT: the vocab axis j must stay the innermost, sequentially
    # iterated ("arbitrary") grid axis so j == 0 runs before any other j for
    # each i on each core; otherwise h_ref would be read uninitialized.
    @pl.when(j == 0)
    def _():
        x = feat_ref[...]                                   # bf16 [TM, E]
        # dense: x @ Wd^T  -- contract last dims of both operands,
        # bf16 x bf16 on the MXU with f32 accumulation.
        h = lax.dot_general(
            x, wd_ref[...],
            dimension_numbers=(((1,), (1,)), ((), ())),
            preferred_element_type=jnp.float32,
        )
        p = p_ref[...]                                      # f32 [3, E]
        h = h + p[0:1, :]                                   # dense bias

        # exact gelu: 0.5 * x * (1 + erf(x / sqrt(2))), in f32
        h = 0.5 * h * (1.0 + lax.erf(h * (1.0 / math.sqrt(2.0))))

        # LayerNorm over E, eps = 1e-5, affine -- stats in f32
        mean = jnp.mean(h, axis=-1, keepdims=True)
        cent = h - mean
        var = jnp.mean(cent * cent, axis=-1, keepdims=True)
        h = cent * lax.rsqrt(var + 1e-5)
        h = h * p[1:2, :] + p[2:3, :]                       # gamma, beta

        h_ref[...] = h.astype(jnp.bfloat16)

    # Output projection for this vocab tile: h @ Wout_tile^T + b_tile.
    logits = lax.dot_general(
        h_ref[...], wout_ref[...],
        dimension_numbers=(((1,), (1,)), ((), ())),
        preferred_element_type=jnp.float32,
    ) + bout_ref[...]
    out_ref[...] = logits.astype(out_ref.dtype)


def roberta_lm_head(features, params, *, tm=1024, tn=1024,
                    out_dtype=jnp.bfloat16):
    """features: [B, T, E] -> logits [B, T, V] (bf16 by default).

    Matmul inputs are fed to the MXU as bf16 with f32 accumulation; the
    logits are written back in bf16 to halve the dominant [N, V] HBM
    writeback (pass out_dtype=jnp.float32 if full-precision logits are
    required downstream).
    """
    B, T, E = features.shape
    wd, bd = params["dense_w"], params["dense_b"]
    gamma, beta = params["ln_g"], params["ln_b"]
    wout, bout = params["out_w"], params["out_b"]
    V = wout.shape[0]
    N = B * T

    tm = _pick_row_tile(N, tm)
    tn = min(tn, _round_up(V, 128))
    n_pad = _round_up(N, tm)
    v_pad = _round_up(V, tn)

    feats2d = features.reshape(N, E).astype(jnp.bfloat16)
    if n_pad != N:
        # Padded zero rows go through LayerNorm with ~zero variance; eps=1e-5
        # keeps them finite and they are sliced off below.
        feats2d = jnp.pad(feats2d, ((0, n_pad - N), (0, 0)))

    wout_bf = wout.astype(jnp.bfloat16)
    bout_f = bout.astype(jnp.float32)
    if v_pad != V:
        wout_bf = jnp.pad(wout_bf, ((0, v_pad - V), (0, 0)))
        bout_f = jnp.pad(bout_f, ((0, v_pad - V),))

    # Pack dense bias / LN gamma / LN beta into one (3, E) f32 operand.
    head_params = jnp.stack(
        [bd.astype(jnp.float32), gamma.astype(jnp.float32),
         beta.astype(jnp.float32)], axis=0)

    grid = (n_pad // tm, v_pad // tn)

    out2d = pl.pallas_call(
        _lm_head_kernel,
        out_shape=jax.ShapeDtypeStruct((n_pad, v_pad), out_dtype),
        grid_spec=pltpu.PrefetchScalarGridSpec(
            num_scalar_prefetch=0,
            grid=grid,
            in_specs=[
                pl.BlockSpec((tm, E), lambda i, j: (i, 0)),      # features
                _invariant_spec((E, E), lambda i, j: (0, 0)),    # dense W
                _invariant_spec((3, E), lambda i, j: (0, 0)),    # bias/g/b
                pl.BlockSpec((tn, E), lambda i, j: (j, 0)),      # W_out tile
                pl.BlockSpec((1, tn), lambda i, j: (0, j)),      # b_out tile
            ],
            out_specs=pl.BlockSpec((tm, tn), lambda i, j: (i, j)),
            scratch_shapes=[pltpu.VMEM((tm, E), jnp.bfloat16)],
        ),
        compiler_params=pltpu.CompilerParams(
            # Row axis parallel (megacore), vocab axis MUST stay "arbitrary"
            # (innermost sequential) -- see kernel invariant on h_ref.
            dimension_semantics=("parallel", "arbitrary"),
            vmem_limit_bytes=_vmem_limit_bytes(tm, tn, E),
        ),
    )(feats2d, wd.astype(jnp.bfloat16), head_params, wout_bf,
      bout_f.reshape(1, v_pad))

    # Slice padded rows / vocab columns off so padded logits never reach a
    # downstream softmax.
    return out2d[:N, :V].reshape(B, T, V)


def _reference(features, params):
    """Pure-JAX f32 reference (matches the PyTorch module)."""
    x = features @ params["dense_w"].T + params["dense_b"]
    x = 0.5 * x * (1.0 + lax.erf(x / jnp.sqrt(2.0)))
    mean = jnp.mean(x, axis=-1, keepdims=True)
    var = jnp.mean((x - mean) ** 2, axis=-1, keepdims=True)
    x = (x - mean) * lax.rsqrt(var + 1e-5)
    x = x * params["ln_g"] + params["ln_b"]
    return x @ params["out_w"].T + params["out_b"]


if __name__ == "__main__":
    # Small shapes consistent with the module: batch=2, seq=8, embed=32, vocab=48
    B, T, E, V = 2, 8, 32, 48

    key = jax.random.PRNGKey(0)
    k_feat, k_wd, k_bd, k_wout = jax.random.split(key, 4)

    features = jax.random.normal(k_feat, (B, T, E), dtype=jnp.float32)

    params = {
        # nn.Linear(embed_dim, embed_dim)
        "dense_w": jax.random.normal(k_wd, (E, E), dtype=jnp.float32) * (1.0 / math.sqrt(E)),
        "dense_b": jax.random.normal(k_bd, (E,), dtype=jnp.float32) * 0.01,
        # LayerNorm(embed_dim): gamma=1, beta=0
        "ln_g": jnp.ones((E,), dtype=jnp.float32),
        "ln_b": jnp.zeros((E,), dtype=jnp.float32),
        # nn.Linear(embed_dim, output_dim, bias=False).weight -> (V, E)
        "out_w": jax.random.normal(k_wout, (V, E), dtype=jnp.float32) * (1.0 / math.sqrt(E)),
        # nn.Parameter(torch.zeros(output_dim))
        "out_b": jnp.zeros((V,), dtype=jnp.float32),
    }

    out = roberta_lm_head(features, params)
    jax.block_until_ready(out)

    ref = _reference(features, params)
    assert out.shape == (B, T, V)
    # Matmul inputs AND the emitted logits are bf16 (accumulation in f32), so
    # per-logit error vs the f32 reference is ~1e-2..3e-2 here; tolerance is
    # loosened accordingly (acceptable for a softmax/loss consumer).
    assert jnp.allclose(out.astype(jnp.float32), ref, atol=1e-1, rtol=1e-1), \
        "mismatch vs reference"

    print("KERNEL_OK")
</pallas_src>

<mosaic_0001>
module attributes {stable_mosaic.version = 11 : i64} {
  func.func @_lm_head_kernel(%arg0: i32, %arg1: i32, %arg2: memref<16x32xbf16, #tpu.memory_space<vmem>>, %arg3: memref<32x32xbf16, #tpu.memory_space<vmem>>, %arg4: memref<3x32xf32, #tpu.memory_space<vmem>>, %arg5: memref<128x32xbf16, #tpu.memory_space<vmem>>, %arg6: memref<1x128xf32, #tpu.memory_space<vmem>>, %arg7: memref<16x128xbf16, #tpu.memory_space<vmem>>, %arg8: memref<16x32xbf16, #tpu.memory_space<vmem>>) attributes {dimension_semantics = [#tpu.dimension_semantics<parallel>, #tpu.dimension_semantics<arbitrary>], iteration_bounds = array<i64: 1, 1>, scalar_prefetch = 0 : i64, scratch_operands = 1 : i64, tpu.core_type = #tpu.core_type<tc>, window_params = [{transform_indices = @transform_0, window_bounds = array<i64: 16, 32>}, {pipeline_mode = #tpu.pipeline_mode<synchronous>, transform_indices = @transform_1, window_bounds = array<i64: 32, 32>}, {pipeline_mode = #tpu.pipeline_mode<synchronous>, transform_indices = @transform_2, window_bounds = array<i64: 3, 32>}, {transform_indices = @transform_3, window_bounds = array<i64: 128, 32>}, {transform_indices = @transform_4, window_bounds = array<i64: 1, 128>}, {transform_indices = @transform_5, window_bounds = array<i64: 16, 128>}]} {
    %c0_i32 = arith.constant 0 : i32
    %0 = arith.cmpi eq, %arg1, %c0_i32 : i32
    %1 = arith.extui %0 : i1 to i32
    %c0_i32_0 = arith.constant 0 : i32
    %2 = arith.cmpi ne, %1, %c0_i32_0 : i32
    scf.if %2 {
      %c0_8 = arith.constant 0 : index
      %c0_9 = arith.constant 0 : index
      %11 = vector.load %arg2[%c0_8, %c0_9] : memref<16x32xbf16, #tpu.memory_space<vmem>>, vector<16x32xbf16>
      %c0_10 = arith.constant 0 : index
      %c0_11 = arith.constant 0 : index
      %12 = vector.load %arg3[%c0_10, %c0_11] : memref<32x32xbf16, #tpu.memory_space<vmem>>, vector<32x32xbf16>
      %cst_12 = arith.constant dense<0.000000e+00> : vector<16x32xf32>
      %13 = tpu.matmul %11, %12, %cst_12 {dimension_numbers = #tpu.dot_dimension_numbers<[1], [1], [0], [0], [0, 0, 1, 0], [], []>} : vector<16x32xbf16>, vector<32x32xbf16>, vector<16x32xf32> -> vector<16x32xf32>
      %c0_13 = arith.constant 0 : index
      %c0_14 = arith.constant 0 : index
      %14 = vector.load %arg4[%c0_13, %c0_14] : memref<3x32xf32, #tpu.memory_space<vmem>>, vector<3x32xf32>
      %15 = vector.extract_strided_slice %14 {offsets = [0, 0], sizes = [1, 32], strides = [1, 1]} : vector<3x32xf32> to vector<1x32xf32>
      %16 = vector.broadcast %15 : vector<1x32xf32> to vector<16x32xf32>
      %17 = arith.addf %13, %16 : vector<16x32xf32>
      %cst_15 = arith.constant 5.000000e-01 : f32
      %18 = vector.broadcast %cst_15 : f32 to vector<16x32xf32>
      %19 = arith.mulf %18, %17 : vector<16x32xf32>
      %cst_16 = arith.constant 0.707106769 : f32
      %20 = vector.broadcast %cst_16 : f32 to vector<16x32xf32>
      %21 = arith.mulf %17, %20 : vector<16x32xf32>
      %22 = math.erf %21 : vector<16x32xf32>
      %cst_17 = arith.constant 1.000000e+00 : f32
      %23 = vector.broadcast %cst_17 : f32 to vector<16x32xf32>
      %24 = arith.addf %23, %22 : vector<16x32xf32>
      %25 = arith.mulf %19, %24 : vector<16x32xf32>
      %cst_18 = arith.constant dense<0.000000e+00> : vector<16xf32>
      %26 = vector.multi_reduction <add>, %25, %cst_18 [1] : vector<16x32xf32> to vector<16xf32>
      %27 = vector.shape_cast %26 : vector<16xf32> to vector<16x1xf32>
      %cst_19 = arith.constant 3.200000e+01 : f32
      %28 = vector.broadcast %cst_19 : f32 to vector<16x1xf32>
      %29 = arith.divf %27, %28 : vector<16x1xf32>
      %30 = vector.broadcast %29 : vector<16x1xf32> to vector<16x32xf32>
      %31 = arith.subf %25, %30 : vector<16x32xf32>
      %32 = arith.mulf %31, %31 : vector<16x32xf32>
      %cst_20 = arith.constant dense<0.000000e+00> : vector<16xf32>
      %33 = vector.multi_reduction <add>, %32, %cst_20 [1] : vector<16x32xf32> to vector<16xf32>
      %34 = vector.shape_cast %33 : vector<16xf32> to vector<16x1xf32>
      %cst_21 = arith.constant 3.200000e+01 : f32
      %35 = vector.broadcast %cst_21 : f32 to vector<16x1xf32>
      %36 = arith.divf %34, %35 : vector<16x1xf32>
      %cst_22 = arith.constant 9.99999974E-6 : f32
      %37 = vector.broadcast %cst_22 : f32 to vector<16x1xf32>
      %38 = arith.addf %36, %37 : vector<16x1xf32>
      %39 = math.rsqrt %38 : vector<16x1xf32>
      %40 = vector.broadcast %39 : vector<16x1xf32> to vector<16x32xf32>
      %41 = arith.mulf %31, %40 : vector<16x32xf32>
      %42 = vector.extract_strided_slice %14 {offsets = [1, 0], sizes = [1, 32], strides = [1, 1]} : vector<3x32xf32> to vector<1x32xf32>
      %43 = vector.broadcast %42 : vector<1x32xf32> to vector<16x32xf32>
      %44 = arith.mulf %41, %43 : vector<16x32xf32>
      %45 = vector.extract_strided_slice %14 {offsets = [2, 0], sizes = [1, 32], strides = [1, 1]} : vector<3x32xf32> to vector<1x32xf32>
      %46 = vector.broadcast %45 : vector<1x32xf32> to vector<16x32xf32>
      %47 = arith.addf %44, %46 : vector<16x32xf32>
      %48 = arith.truncf %47 : vector<16x32xf32> to vector<16x32xbf16>
      %c0_23 = arith.constant 0 : index
      %c0_24 = arith.constant 0 : index
      %49 = vector.load %arg8[%c0_23, %c0_24] : memref<16x32xbf16, #tpu.memory_space<vmem>>, vector<16x32xbf16>
      tpu.vector_store %arg8[%c0_23, %c0_24], %48 {strides = array<i32>} : memref<16x32xbf16, #tpu.memory_space<vmem>>, vector<16x32xbf16>,
    } else {
    }
    %c0 = arith.constant 0 : index
    %c0_1 = arith.constant 0 : index
    %3 = vector.load %arg8[%c0, %c0_1] : memref<16x32xbf16, #tpu.memory_space<vmem>>, vector<16x32xbf16>
    %c0_2 = arith.constant 0 : index
    %c0_3 = arith.constant 0 : index
    %4 = vector.load %arg5[%c0_2, %c0_3] : memref<128x32xbf16, #tpu.memory_space<vmem>>, vector<128x32xbf16>
    %cst = arith.constant dense<0.000000e+00> : vector<16x128xf32>
    %5 = tpu.matmul %3, %4, %cst {dimension_numbers = #tpu.dot_dimension_numbers<[1], [1], [0], [0], [0, 0, 1, 0], [], []>} : vector<16x32xbf16>, vector<128x32xbf16>, vector<16x128xf32> -> vector<16x128xf32>
    %c0_4 = arith.constant 0 : index
    %c0_5 = arith.constant 0 : index
    %6 = vector.load %arg6[%c0_4, %c0_5] : memref<1x128xf32, #tpu.memory_space<vmem>>, vector<1x128xf32>
    %7 = vector.broadcast %6 : vector<1x128xf32> to vector<16x128xf32>
    %8 = arith.addf %5, %7 : vector<16x128xf32>
    %9 = arith.truncf %8 : vector<16x128xf32> to vector<16x128xbf16>
    %c0_6 = arith.constant 0 : index
    %c0_7 = arith.constant 0 : index
    %10 = vector.load %arg7[%c0_6, %c0_7] : memref<16x128xbf16, #tpu.memory_space<vmem>>, vector<16x128xbf16>
    tpu.vector_store %arg7[%c0_6, %c0_7], %9 {strides = array<i32>} : memref<16x128xbf16, #tpu.memory_space<vmem>>, vector<16x128xbf16>,
    return
  }
  func.func @transform_0(%arg0: i32, %arg1: i32) -> (i32, i32) {
    %c0_i32 = arith.constant 0 : i32
    %c0_i32_0 = arith.constant 0 : i32
    return %arg0, %c0_i32 : i32, i32
  }
  func.func @transform_1(%arg0: i32, %arg1: i32) -> (i32, i32) {
    %c0_i32 = arith.constant 0 : i32
    %c0_i32_0 = arith.constant 0 : i32
    %c0_i32_1 = arith.constant 0 : i32
    return %c0_i32, %c0_i32_0 : i32, i32
  }
  func.func @transform_2(%arg0: i32, %arg1: i32) -> (i32, i32) {
    %c0_i32 = arith.constant 0 : i32
    %c0_i32_0 = arith.constant 0 : i32
    %c0_i32_1 = arith.constant 0 : i32
    return %c0_i32, %c0_i32_0 : i32, i32
  }
  func.func @transform_3(%arg0: i32, %arg1: i32) -> (i32, i32) {
    %c0_i32 = arith.constant 0 : i32
    %c0_i32_0 = arith.constant 0 : i32
    return %arg1, %c0_i32 : i32, i32
  }
  func.func @transform_4(%arg0: i32, %arg1: i32) -> (i32, i32) {
    %c0_i32 = arith.constant 0 : i32
    %c0_i32_0 = arith.constant 0 : i32
    return %c0_i32, %arg1 : i32, i32
  }
  func.func @transform_5(%arg0: i32, %arg1: i32) -> (i32, i32) {
    %c0_i32 = arith.constant 0 : i32
    return %arg0, %arg1 : i32, i32
  }
}

</mosaic_0001>

<llo_original>
// kernel: tpu_custom_call.1
$region0: #{tpu_custom_call.1}
  #allocation0 [shape = 'u32[]', space=smem, size = 0x4, offset = 0x4, fixed_abs, tag = 'smem constant byte address 0x4 - core index']
  #allocation1 [shape = 'u32[72,128]{1,0:T(1,128)}', space=vmem, size = 0x9000, scoped, tag = 'internal scratch']
  #allocation2 [shape = 'bf16[16,32]{1,0:T(8,128)(2,1)}', space=vmem, size = 0x1000, scoped, tag = 'scratch operand']
  %s0 = inlined_call_operand.vmem [shape: bf16[16,32], index: 0, kind: input, shape index: {}]
  %s1 = inlined_call_operand.vmem [shape: bf16[32,32], index: 1, kind: input, shape index: {}]
  %s2 = inlined_call_operand.vmem [shape: f32[3,32], index: 2, kind: input, shape index: {}]
  %s3 = inlined_call_operand.vmem [shape: bf16[128,32], index: 3, kind: input, shape index: {}]
  %s4 = inlined_call_operand.vmem [shape: f32[1,128], index: 4, kind: input, shape index: {}]
  %s5 = inlined_call_operand.hbm [shape: bf16[16,128], index: 5, kind: output, shape index: {}]
  %s6 = sld [smem:[#allocation0]]
  $region34: #{tpu_custom_call.1} parent=0
    _
  %s8 = ssub.s32 1, %s6
  %s9 = scalar_select 0, %s8, %s6
  $region1: #{tpu_custom_call.1} parent=0
    #allocation3 [shape = 'u8[4096]{0}', space=vmem, size = 0x1000, scoped, tag = 'output window, operand 0, single buffered']
    #allocation4 [shape = 's32[1]{0}', space=sflag, size = 0x4, scoped, tag = 'scoped memory for tpu_custom_call.1']
    %10 = vsyncpa [#allocation4], 0
    // Predicated region
    $region2: #{tpu_custom_call.1} parent=1 // pred_check
      _
    $region3: #{tpu_custom_call.1} parent=1 // pred_check_branch
      %12 = sbr.rel (0) target = $region5
    $region4: #{tpu_custom_call.1} parent=1 // pred_region
      _
    $region5: #{tpu_custom_call.1} parent=1 // pred_fallthru
      _
    // Predicated region
    $region6: #{tpu_custom_call.1} parent=1 // pred_check
      _
    $region7: #{tpu_custom_call.1} parent=1 // pred_check_branch
      %14 = sbr.rel (0) target = $region9
    $region8: #{tpu_custom_call.1} parent=1 // pred_region
      _
    $region9: #{tpu_custom_call.1} parent=1 // pred_fallthru
      _
    // Predicated region
    $region10: #{tpu_custom_call.1} parent=1 // pred_check
      _
    $region11: #{tpu_custom_call.1} parent=1 // pred_check_branch
      %16 = sbr.rel (0) target = $region13
    $region12: #{tpu_custom_call.1} parent=1 // pred_region
      _
    $region13: #{tpu_custom_call.1} parent=1 // pred_fallthru
      _
    // Predicated region
    $region14: #{tpu_custom_call.1} parent=1 // pred_check
      _
    $region15: #{tpu_custom_call.1} parent=1 // pred_check_branch
      %18 = sbr.rel (0) target = $region17
    $region16: #{tpu_custom_call.1} parent=1 // pred_region
      _
    $region17: #{tpu_custom_call.1} parent=1 // pred_fallthru
      _
    // Predicated region
    $region18: #{tpu_custom_call.1} parent=1 // pred_check
      _
    $region19: #{tpu_custom_call.1} parent=1 // pred_check_branch
      %20 = sbr.rel (0) target = $region21
    $region20: #{tpu_custom_call.1} parent=1 // pred_region
      _
    $region21: #{tpu_custom_call.1} parent=1 // pred_fallthru
      _
    %p22 = scmp.eq.s32.totalorder 0, 0
    // Predicated region
    $region22: #{tpu_custom_call.1} parent=1 // pred_check
      %p23 = pneg %p22
    $region23: #{tpu_custom_call.1} parent=1 // pred_check_branch
      %25 = sbr.rel (%p23) target = $region25
    $region24: #{tpu_custom_call.1} parent=1 // pred_region
      %v26 = vld [vmem:[%s0] sm:$0xf]
      %v27 = vld [vmem:[%s0 + $0x4] sm:$0xf]
      %v28 = vld [vmem:[%s1] sm:$0xf]
      %v29 = vld [vmem:[%s1 + $0x4] sm:$0xf]
      %v30 = vld [vmem:[%s1 + $0x8] sm:$0xf]
      %v31 = vld [vmem:[%s1 + $0xc] sm:$0xf]
      %v32 = vld [vmem:[%s2] sm:$0x7]
      %v33 = vperm.slane %v32, 0
      %v36 = vunpack.c.l.b16 %v26
      %v37 = vunpack.c.l.b16 %v27
      %v38 = vpack.c.b16 %v37, %v36
      %v43 = vunpack.c.l.b16 %v28
      %v44 = vunpack.c.l.b16 %v29
      %v45 = vunpack.c.l.b16 %v30
      %v46 = vunpack.c.l.b16 %v31
      %v47 = vpack.c.b16 %v44, %v43
      %v48 = vpack.c.b16 %v46, %v45
      %vm49 = vcmask 261120
      %v51 = vsel %vm49, %v38, 0
      %v54 = vsel %vm49, %v47, 0
      %v57 = vsel %vm49, %v48, 0
      %59 = vmatpush.bf16.xpose.msra.mxu0 0
      %60 = vmatpush.bf16.xpose.msra.mxu0 0
      %61 = vmatpush.bf16.xpose.msra.mxu0 0
      %62 = vmatpush.bf16.xpose.msra.mxu0 0
      %63 = vmatpush.bf16.xpose.msra.mxu0 0
      %64 = vmatpush.bf16.xpose.msra.mxu0 0
      %65 = vmatpush.bf16.xpose.msra.mxu0 %v57
      %66 = vmatpush.bf16.xpose.msra.mxu0 %v54
      %67 = vmatmul.bf16.gmra.mxu0 %v51
      %v68 = vpop.f32.mrf.mxu0
      %v69 = vadd.f32 %v33, %v68
      %v70 = vpop.f32.mrf.mxu0
      %v71 = vadd.f32 %v33, %v70
      %72 = vdwg.mxu0
      %v73 = vmul.f32 %v69, 0.5
      %v74 = vmul.f32 %v71, 0.5
      %v75 = vmul.f32 %v69, 0.70710677
      %v76 = vmul.f32 %v71, 0.70710677
      %v77 = vmul.f32 %v75, %v75
      %v78 = vmin.f32 16.0, %v77
      %v79 = vmul.f32 %v78, 2.1237322e-06
      %v80 = vadd.f32 %v79, 0.00028619796
      %v81 = vmul.f32 %v78, %v80
      %v82 = vadd.f32 %v81, 0.0036580483
      %v83 = vmul.f32 %v78, %v82
      %v84 = vadd.f32 %v83, 0.05243302
      %v85 = vmul.f32 %v78, %v84
      %v86 = vadd.f32 %v85, 0.18741608
      %v87 = vmul.f32 %v78, %v86
      %v88 = vadd.f32 %v87, 1.1283791
      %v89 = vmul.f32 %v75, %v88
      %v90 = vmul.f32 %v78, 3.8918573e-05
      %v91 = vadd.f32 %v90, 0.001143296
      %v92 = vmul.f32 %v78, %v91
      %v93 = vadd.f32 %v92, 0.014752088
      %v94 = vmul.f32 %v78, %v93
      %v95 = vadd.f32 %v94, 0.112945676
      %v96 = vmul.f32 %v78, %v95
      %v97 = vadd.f32 %v96, 0.4994258
      %v98 = vmul.f32 %v78, %v97
      %v99 = vadd.f32 %v98, 1.0
      %v100 = vrcp.pop %v99
      %v101 = vmul.f32 %v99, %v100
      %v102 = vsub.f32 1.0, %v101
      %v103 = vmul.f32 %v100, %v102
      %v104 = vadd.f32 %v100, %v103
      %vm105 = vweird.f32 %v99
      %vm106 = vweird.f32 %v100
      %vm107 = vmor %vm105, %vm106
      %v108 = vsel %vm107, %v100, %v104
      %v109 = vand.u32 2147483647, %v99
      %vm110 = vcmp.eq.f32.partialorder %v109, 8.507059e+37
      %v111 = vand.u32 %v99, 2147483648
      %v112 = vor.u32 1.1754944e-38, %v111
      %v113 = vsel %vm110, %v112, %v108
      %v114 = vmul.f32 %v89, %v113
      %v115 = vmin.f32 %v114, 1.0
      %v116 = vmax.f32 %v115, -1.0
      %v117 = vmul.f32 %v76, %v76
      %v118 = vmin.f32 16.0, %v117
      %v119 = vmul.f32 %v118, 2.1237322e-06
      %v120 = vadd.f32 %v119, 0.00028619796
      %v121 = vmul.f32 %v118, %v120
      %v122 = vadd.f32 %v121, 0.0036580483
      %v123 = vmul.f32 %v118, %v122
      %v124 = vadd.f32 %v123, 0.05243302
      %v125 = vmul.f32 %v118, %v124
      %v126 = vadd.f32 %v125, 0.18741608
      %v127 = vmul.f32 %v118, %v126
      %v128 = vadd.f32 %v127, 1.1283791
      %v129 = vmul.f32 %v76, %v128
      %v130 = vmul.f32 %v118, 3.8918573e-05
      %v131 = vadd.f32 %v130, 0.001143296
      %v132 = vmul.f32 %v118, %v131
      %v133 = vadd.f32 %v132, 0.014752088
      %v134 = vmul.f32 %v118, %v133
      %v135 = vadd.f32 %v134, 0.112945676
      %v136 = vmul.f32 %v118, %v135
      %v137 = vadd.f32 %v136, 0.4994258
      %v138 = vmul.f32 %v118, %v137
      %v139 = vadd.f32 %v138, 1.0
      %v140 = vrcp.pop %v139
      %v141 = vmul.f32 %v139, %v140
      %v142 = vsub.f32 1.0, %v141
      %v143 = vmul.f32 %v140, %v142
      %v144 = vadd.f32 %v140, %v143
      %vm145 = vweird.f32 %v139
      %vm146 = vweird.f32 %v140
      %vm147 = vmor %vm145, %vm146
      %v148 = vsel %vm147, %v140, %v144
      %v149 = vand.u32 2147483647, %v139
      %vm150 = vcmp.eq.f32.partialorder %v149, 8.507059e+37
      %v151 = vand.u32 %v139, 2147483648
      %v152 = vor.u32 1.1754944e-38, %v151
      %v153 = vsel %vm150, %v152, %v148
      %v154 = vmul.f32 %v129, %v153
      %v155 = vmin.f32 %v154, 1.0
      %v156 = vmax.f32 %v155, -1.0
      %v157 = vadd.f32 %v116, 1.0
      %v158 = vadd.f32 %v156, 1.0
      %v159 = vmul.f32 %v73, %v157
      %v160 = vmul.f32 %v74, %v158
      %v161 = vsel %vm49, %v159, 0.0
      %162 = vadd.xlane.f32.xlu0 %v161
      %v163 = vpop.xlane.xlu0 %162
      %v164 = vsel %vm49, %v160, 0.0
      %165 = vadd.xlane.f32.xlu0 %v164
      %v166 = vpop.xlane.xlu0 %165
      %v167 = vrcp.pop 32.0
      %v168 = vmul.f32 32.0, %v167
      %v169 = vsub.f32 1.0, %v168
      %v170 = vmul.f32 %v167, %v169
      %v171 = vadd.f32 %v167, %v170
      %vm172 = vweird.f32 %v167
      %v173 = vsel %vm172, %v167, %v171
      %v174 = vmul.f32 %v163, %v173
      %v175 = vmul.f32 %v166, %v173
      %v176 = vsub.f32 %v159, %v174
      %v177 = vsub.f32 %v160, %v175
      %v178 = vmul.f32 %v176, %v176
      %v179 = vmul.f32 %v177, %v177
      %v180 = vsel %vm49, %v178, 0.0
      %181 = vadd.xlane.f32.xlu0 %v180
      %v182 = vpop.xlane.xlu0 %181
      %v183 = vsel %vm49, %v179, 0.0
      %184 = vadd.xlane.f32.xlu0 %v183
      %v185 = vpop.xlane.xlu0 %184
      %v186 = vmul.f32 %v182, %v173
      %v187 = vmul.f32 %v185, %v173
      %v188 = vadd.f32 %v186, 1e-05
      %v189 = vadd.f32 %v187, 1e-05
      %v190 = vrsqrt.pop %v188
      %v191 = vmul.f32 %v190, %v188
      %v192 = vmul.f32 %v191, %v190
      %v193 = vmul.f32 0.5, %v192
      %v194 = vsub.f32 1.5, %v193
      %v195 = vmul.f32 %v190, %v194
      %vm196 = vweird.f32 %v188
      %vm197 = vweird.f32 %v190
      %vm198 = vmor %vm196, %vm197
      %v199 = vsel %vm198, %v190, %v195
      %v200 = vrsqrt.pop %v189
      %v201 = vmul.f32 %v200, %v189
      %v202 = vmul.f32 %v201, %v200
      %v203 = vmul.f32 0.5, %v202
      %v204 = vsub.f32 1.5, %v203
      %v205 = vmul.f32 %v200, %v204
      %vm206 = vweird.f32 %v189
      %vm207 = vweird.f32 %v200
      %vm208 = vmor %vm206, %vm207
      %v209 = vsel %vm208, %v200, %v205
      %v210 = vmul.f32 %v176, %v199
      %v211 = vmul.f32 %v177, %v209
      %v212 = vperm.slane %v32, 1
      %v213 = vmul.f32 %v210, %v212
      %v214 = vmul.f32 %v211, %v212
      %v215 = vperm.slane %v32, 2
      %v216 = vadd.f32 %v213, %v215
      %v217 = vadd.f32 %v214, %v215
      %v218 = vpack.c.bf16 %v216, %v216
      %v219 = vpack.c.bf16 %v217, %v217
      %vm220 = vcmask 257024
      %221 = vst.msk [vmem:[#allocation2] sm:$0xf] %vm220, %v218
      %222 = vst.msk [vmem:[#allocation2 + $0x4] sm:$0xf] %vm220, %v219
    $region25: #{tpu_custom_call.1} parent=1 // pred_fallthru
      _
    %v223 = vld [vmem:[#allocation2] sm:$0xf]
    %v224 = vld [vmem:[#allocation2 + $0x4] sm:$0xf]
    %v225 = vld [vmem:[%s3] sm:$0xf]
    %v226 = vld [vmem:[%s3 + $0x4] sm:$0xf]
    %v227 = vld [vmem:[%s3 + $0x8] sm:$0xf]
    %v228 = vld [vmem:[%s3 + $0xc] sm:$0xf]
    %v229 = vld [vmem:[%s3 + $0x10] sm:$0xf]
    %v230 = vld [vmem:[%s3 + $0x14] sm:$0xf]
    %v231 = vld [vmem:[%s3 + $0x18] sm:$0xf]
    %v232 = vld [vmem:[%s3 + $0x1c] sm:$0xf]
    %v233 = vld [vmem:[%s3 + $0x20] sm:$0xf]
    %v234 = vld [vmem:[%s3 + $0x24] sm:$0xf]
    %v235 = vld [vmem:[%s3 + $0x28] sm:$0xf]
    %v236 = vld [vmem:[%s3 + $0x2c] sm:$0xf]
    %v237 = vld [vmem:[%s3 + $0x30] sm:$0xf]
    %v238 = vld [vmem:[%s3 + $0x34] sm:$0xf]
    %v239 = vld [vmem:[%s3 + $0x38] sm:$0xf]
    %v240 = vld [vmem:[%s3 + $0x3c] sm:$0xf]
    %v241 = vld [vmem:[%s4] sm:$0x1]
    %v243 = vperm.slane %v241, 0
    %v247 = vunpack.c.l.b16 %v223
    %v248 = vunpack.c.l.b16 %v224
    %v249 = vpack.c.b16 %v248, %v247
    %v266 = vunpack.c.l.b16 %v225
    %v267 = vunpack.c.l.b16 %v226
    %v268 = vunpack.c.l.b16 %v227
    %v269 = vunpack.c.l.b16 %v228
    %v270 = vunpack.c.l.b16 %v229
    %v271 = vunpack.c.l.b16 %v230
    %v272 = vunpack.c.l.b16 %v231
    %v273 = vunpack.c.l.b16 %v232
    %v274 = vunpack.c.l.b16 %v233
    %v275 = vunpack.c.l.b16 %v234
    %v276 = vunpack.c.l.b16 %v235
    %v277 = vunpack.c.l.b16 %v236
    %v278 = vunpack.c.l.b16 %v237
    %v279 = vunpack.c.l.b16 %v238
    %v280 = vunpack.c.l.b16 %v239
    %v281 = vunpack.c.l.b16 %v240
    %v282 = vpack.c.b16 %v267, %v266
    %v283 = vpack.c.b16 %v269, %v268
    %v284 = vpack.c.b16 %v271, %v270
    %v285 = vpack.c.b16 %v273, %v272
    %v286 = vpack.c.b16 %v275, %v274
    %v287 = vpack.c.b16 %v277, %v276
    %v288 = vpack.c.b16 %v279, %v278
    %v289 = vpack.c.b16 %v281, %v280
    %vm290 = vcmask 261120
    %v292 = vsel %vm290, %v249, 0
    %v295 = vsel %vm290, %v282, 0
    %v298 = vsel %vm290, %v283, 0
    %v301 = vsel %vm290, %v284, 0
    %v304 = vsel %vm290, %v285, 0
    %v307 = vsel %vm290, %v286, 0
    %v310 = vsel %vm290, %v287, 0
    %v313 = vsel %vm290, %v288, 0
    %v316 = vsel %vm290, %v289, 0
    %318 = vmatpush.bf16.xpose.msra.mxu0 %v316
    %319 = vmatpush.bf16.xpose.msra.mxu0 %v313
    %320 = vmatpush.bf16.xpose.msra.mxu0 %v310
    %321 = vmatpush.bf16.xpose.msra.mxu0 %v307
    %322 = vmatpush.bf16.xpose.msra.mxu0 %v304
    %323 = vmatpush.bf16.xpose.msra.mxu0 %v301
    %324 = vmatpush.bf16.xpose.msra.mxu0 %v298
    %325 = vmatpush.bf16.xpose.msra.mxu0 %v295
    %326 = vmatmul.bf16.gmra.mxu0 %v292
    %v327 = vpop.f32.mrf.mxu0
    %v328 = vadd.f32 %v243, %v327
    %v329 = vpop.f32.mrf.mxu0
    %v330 = vadd.f32 %v243, %v329
    %331 = vdwg.mxu0
    %v332 = vpack.c.bf16 %v328, %v328
    %v333 = vpack.c.bf16 %v330, %v330
    %334 = vst [vmem:[#allocation3] sm:$0xf] %v332
    %335 = vst [vmem:[#allocation3 + $0x4] sm:$0xf] %v333
    // Predicated region
    $region26: #{tpu_custom_call.1} parent=1 // pred_check
      _
    $region27: #{tpu_custom_call.1} parent=1 // pred_check_branch
      %337 = sbr.rel (0) target = $region29
    $region28: #{tpu_custom_call.1} parent=1 // pred_region
      %339 = vsyncadd [#allocation4], 0
      %s340 = sshll.u32 [#allocation3], 4
      %s341 = int_to_ptr.vmem [resolvable:$true] %s340
      %s342 = sshll.u32 %s5, 4
      %s343 = int_to_ptr.hbm [resolvable:$true] %s342
      %348 = dma.vmem_to_hbm [thread:$0]  %s341, 128, %s343, [#allocation4], 64, 64, 4
    $region29: #{tpu_custom_call.1} parent=1 // pred_fallthru
      _
    // Predicated region
    $region30: #{tpu_custom_call.1} parent=1 // pred_check
      _
    $region31: #{tpu_custom_call.1} parent=1 // pred_check_branch
      %350 = sbr.rel (0) target = $region33
    $region32: #{tpu_custom_call.1} parent=1 // pred_region
      %352 = dma.done [#allocation4], 128
    $region33: #{tpu_custom_call.1} parent=1 // pred_fallthru
      _
    %353 = vsyncpa [#allocation4], 1

</llo_original>
